<compile_context>
chip_gen: v6e
topology: v6e:2x2x1
jax: 0.10.0
libtpu: 0.0.40
codegen_flags: <defaults>
</compile_context>

<pallas_src>
import functools

import numpy as np
import jax
import jax.numpy as jnp
from jax.experimental import pallas as pl
from jax.experimental.pallas import tpu as pltpu

_BIG = float("inf")          # knockout / init sentinel for cost values
_IMAX = 2 ** 31 - 1          # tie-break sentinel for indices
_QPAD = 1e30                 # padding value for padded query boxes (finite, huge)


def _round_up(x, m):
    return ((x + m - 1) // m) * m


def _cdiv(a, b):
    return -(-a // b)


def _box_xyxy_to_cxcywh(b):
    x0, y0, x1, y1 = b[..., 0], b[..., 1], b[..., 2], b[..., 3]
    return jnp.stack([(x0 + x1) * 0.5, (y0 + y1) * 0.5, x1 - x0, y1 - y0], axis=-1)


# ---------------------------------------------------------------------------
# Fused kernel: L1 cost (queries on sublanes, targets on lanes) + streaming
# per-column top-k-smallest merge into a resident (k_pad, M_pad) buffer.
# Tie-breaking: smallest query index wins (== stable argsort; torch.topk's tie
# order is unspecified, so only pathological exact-tie cases can differ).
# ---------------------------------------------------------------------------
def _matcher_kernel(boxes_ref, tgt_ref, idx_ref, vals_ref, *, k, tile_q):
    q_tile = pl.program_id(1)

    @pl.when(q_tile == 0)
    def _init():
        vals_ref[...] = jnp.full(vals_ref.shape, _BIG, jnp.float32)
        idx_ref[...] = jnp.full(idx_ref.shape, _IMAX, jnp.int32)

    b = boxes_ref[...].astype(jnp.float32)      # (tile_q, 4)  cxcywh queries
    t = tgt_ref[...].astype(jnp.float32)        # (4, m_pad)   cxcywh targets

    # Pairwise L1 cost tile: (tile_q, m_pad), targets lane-dense.
    cost = jnp.abs(b[:, 0:1] - t[0:1, :])
    for d in range(1, 4):
        cost = cost + jnp.abs(b[:, d:d + 1] - t[d:d + 1, :])

    # Query ids as a lane-replicated (tile_q, 1) column; rely on implicit
    # broadcasting in the compares (no full 2-D id array is materialized).
    row_col = jax.lax.broadcasted_iota(jnp.int32, (tile_q, 1), 0) + q_tile * tile_q

    # --- tile-local top-k over the cost tile (store-free knockout) ----------
    tile_vals, tile_ids = [], []
    excl = None
    for j in range(k):
        v = cost if excl is None else jnp.where(excl, _BIG, cost)
        col_min = jnp.min(v, axis=0, keepdims=True)                    # (1, m_pad)
        winner = jnp.min(jnp.where(v == col_min, row_col, _IMAX),
                         axis=0, keepdims=True)                        # (1, m_pad)
        tile_vals.append(col_min)
        tile_ids.append(winner)
        if j + 1 < k:                       # exclusion mask only needed for next pass
            sel = row_col == winner
            excl = sel if excl is None else (excl | sel)

    # --- merge the k tile winners with the resident top-k (tiny pass) -------
    mvals = jnp.concatenate([vals_ref[...]] + tile_vals, axis=0)   # (k_pad+k, m_pad)
    mids = jnp.concatenate([idx_ref[...]] + tile_ids, axis=0)
    out_vals, out_ids = [], []
    for j in range(k):
        col_min = jnp.min(mvals, axis=0, keepdims=True)
        winner = jnp.min(jnp.where(mvals == col_min, mids, _IMAX),
                         axis=0, keepdims=True)
        out_vals.append(col_min)
        out_ids.append(winner)
        if j + 1 < k:
            mvals = jnp.where(mids == winner, _BIG, mvals)
    # Only rows [0, k) change; sentinel rows [k, k_pad) keep their init values.
    vals_ref[0:k, :] = jnp.concatenate(out_vals, axis=0)
    idx_ref[0:k, :] = jnp.concatenate(out_ids, axis=0)


@functools.partial(jax.jit, static_argnames=("match_times", "tile_q"))
def uniform_topk(boxes_cxcywh, targets_cxcywh, *, match_times, tile_q=1024):
    """boxes_cxcywh: (G, Q, 4); targets_cxcywh: (M, 4).

    Returns (G, match_times, M) int32: indices of the match_times smallest L1
    costs along Q for each target column (smallest-index tie-break)."""
    g, q, _ = boxes_cxcywh.shape
    m = targets_cxcywh.shape[0]
    assert q >= match_times, "need at least match_times queries per image"

    m_pad = _round_up(m, 128)
    k_pad = _round_up(match_times, 8)

    # Tile sizing: multiples of 8 (f32 sublane req.), balanced across tiles so
    # the last tile is not mostly _QPAD padding, and capped so the ~8 live
    # (tile_q, m_pad) f32/int32 temporaries of the k-loop stay well under the
    # scoped-VMEM limit on every generation (v5e 16 MiB default, v7x 64 MiB
    # physical). vmem_limit_bytes is raised explicitly below.
    vmem_temp_budget = 12 * 1024 * 1024
    cap = max(8, ((vmem_temp_budget // (8 * 4 * m_pad)) // 8) * 8)
    tile_max = max(8, min(int(tile_q), cap))
    n_tiles = _cdiv(q, tile_max)
    tq = _round_up(_cdiv(q, n_tiles), 8)
    q_pad = _round_up(q, tq)

    # Pad queries with a huge finite value (never selected while >= k real rows
    # exist); pad targets with zeros (padded columns are sliced off below).
    boxes_p = jnp.pad(boxes_cxcywh.astype(jnp.float32),
                      ((0, 0), (0, q_pad - q), (0, 0)),
                      constant_values=_QPAD)
    tgt_p = jnp.pad(targets_cxcywh.astype(jnp.float32),
                    ((0, m_pad - m), (0, 0))).T          # (4, m_pad), M lane-dense

    kern = functools.partial(_matcher_kernel, k=match_times, tile_q=tq)
    out = pl.pallas_call(
        kern,
        out_shape=jax.ShapeDtypeStruct((g, k_pad, m_pad), jnp.int32),
        grid=(g, q_pad // tq),
        in_specs=[
            pl.BlockSpec((None, tq, 4), lambda gi, qi: (gi, qi, 0)),
            pl.BlockSpec((4, m_pad), lambda gi, qi: (0, 0)),   # resident targets
        ],
        # Same block for every q tile -> output is the resident index buffer.
        out_specs=pl.BlockSpec((None, k_pad, m_pad), lambda gi, qi: (gi, 0, 0)),
        scratch_shapes=[pltpu.VMEM((k_pad, m_pad), jnp.float32)],
        compiler_params=pltpu.CompilerParams(
            dimension_semantics=("parallel", "arbitrary"),
            vmem_limit_bytes=32 * 1024 * 1024),
    )(boxes_p, tgt_p)
    return out[:, :match_times, :m]


# ---------------------------------------------------------------------------
# UniformMatcher forward (matches the PyTorch module's output)
# ---------------------------------------------------------------------------
def uniform_matcher(pred_boxes, anchors, all_targets, sizes, match_times=4,
                    tile_q=1024):
    """
    pred_boxes: (bs, num_queries, 4) xyxy
    anchors:    (bs, num_queries, 4) xyxy
    all_targets:(sum(sizes), 4) xyxy
    sizes:      python list, #gt boxes per image (len == bs)
    Returns: list of (i, j) int64 numpy index arrays, one tuple per image.
    """
    bs = pred_boxes.shape[0]

    # Pred-box and anchor costs in ONE fused pallas_call: stack on a leading
    # axis of size 2*bs (pred: [0, bs), anchors: [bs, 2*bs)) -> even "parallel"
    # grid axis for megacore sharding on v7x.
    boxes_c = _box_xyxy_to_cxcywh(jnp.concatenate([pred_boxes, anchors], axis=0))
    tgt_c = _box_xyxy_to_cxcywh(all_targets)

    topk = uniform_topk(boxes_c, tgt_c, match_times=match_times, tile_q=tile_q)
    topk = jax.device_get(topk)              # (2*bs, K, M) int32, single D2H copy
    topk_pred, topk_anch = topk[:bs], topk[bs:]

    # TODO(synk): per-image ragged (i, j) list assembly has no device-array
    # equivalent; kept host-side numpy, same as the .cpu()/numpy glue in torch.
    offsets = np.concatenate([[0], np.cumsum(np.asarray(sizes))]).astype(int)
    results = []
    for b in range(bs):
        s = int(sizes[b])
        lo, hi = offsets[b], offsets[b] + s
        idx = topk_pred[b][:, lo:hi]                      # (K, s)
        idx1 = topk_anch[b][:, lo:hi]                     # (K, s)
        i_parts, j_parts = [], []
        for kk in range(match_times):
            i_parts.append(np.concatenate([idx[kk], idx1[kk]]))
            j_parts.append(np.concatenate([np.arange(s), np.arange(s)]))
        results.append((np.hstack(i_parts).astype(np.int64),
                        np.hstack(j_parts).astype(np.int64)))
    return results


# ---------------------------------------------------------------------------
# numpy reference (no torch) for sanity checking
# ---------------------------------------------------------------------------
def _np_cxcywh(b):
    b = np.asarray(b, np.float32)
    return np.stack([(b[..., 0] + b[..., 2]) * 0.5, (b[..., 1] + b[..., 3]) * 0.5,
                     b[..., 2] - b[..., 0], b[..., 3] - b[..., 1]], axis=-1)


def _np_l1_cost(p, t):
    c = np.zeros((p.shape[0], t.shape[0]), np.float32)
    for d in range(4):
        c = c + np.abs(p[:, d:d + 1] - t[None, :, d])
    return c


def _np_reference_matcher(pred_boxes, anchors, all_targets, sizes, match_times):
    pred = np.asarray(pred_boxes, np.float32)
    anc = np.asarray(anchors, np.float32)
    bs, nq = pred.shape[:2]
    p = _np_cxcywh(pred.reshape(-1, 4))
    a = _np_cxcywh(anc.reshape(-1, 4))
    t = _np_cxcywh(all_targets)
    C = _np_l1_cost(p, t).reshape(bs, nq, -1)
    C1 = _np_l1_cost(a, t).reshape(bs, nq, -1)
    offsets = np.concatenate([[0], np.cumsum(np.asarray(sizes))]).astype(int)
    results = []
    for b in range(bs):
        s = int(sizes[b]); lo = offsets[b]; hi = lo + s
        idx = np.argsort(C[b][:, lo:hi], axis=0, kind="stable")[:match_times]
        idx1 = np.argsort(C1[b][:, lo:hi], axis=0, kind="stable")[:match_times]
        i_parts, j_parts = [], []
        for kk in range(match_times):
            i_parts.append(np.concatenate([idx[kk], idx1[kk]]))
            j_parts.append(np.concatenate([np.arange(s), np.arange(s)]))
        results.append((np.hstack(i_parts).astype(np.int64),
                        np.hstack(j_parts).astype(np.int64)))
    return results


def _make_boxes(key, shape):
    k1, k2 = jax.random.split(key)
    x0y0 = jax.random.uniform(k1, shape[:-1] + (2,), minval=0.0, maxval=0.7)
    wh = jax.random.uniform(k2, shape[:-1] + (2,), minval=0.05, maxval=0.3)
    return jnp.concatenate([x0y0, x0y0 + wh], axis=-1).astype(jnp.float32)


if __name__ == "__main__":
    match_times = 4

    # --- config 1: small shapes (single query tile) ---
    bs, num_queries = 2, 16
    sizes = [3, 5]
    total_gt = sum(sizes)

    key = jax.random.PRNGKey(0)
    k1, k2, k3 = jax.random.split(key, 3)
    pred_boxes = _make_boxes(k1, (bs, num_queries, 4))
    anchors = _make_boxes(k2, (bs, num_queries, 4))
    all_targets = _make_boxes(k3, (total_gt, 4))

    # kernel-level check: fused cost + top-k indices vs stable-argsort reference
    boxes_c = _box_xyxy_to_cxcywh(jnp.concatenate([pred_boxes, anchors], axis=0))
    tgt_c = _box_xyxy_to_cxcywh(all_targets)
    topk = uniform_topk(boxes_c, tgt_c, match_times=match_times)
    jax.block_until_ready(topk)
    topk_np = np.asarray(topk)

    p_np = _np_cxcywh(np.asarray(pred_boxes).reshape(-1, 4)).reshape(bs, num_queries, 4)
    a_np = _np_cxcywh(np.asarray(anchors).reshape(-1, 4)).reshape(bs, num_queries, 4)
    t_np = _np_cxcywh(np.asarray(all_targets))
    for b in range(bs):
        ref = np.argsort(_np_l1_cost(p_np[b], t_np), axis=0, kind="stable")[:match_times]
        ref1 = np.argsort(_np_l1_cost(a_np[b], t_np), axis=0, kind="stable")[:match_times]
        np.testing.assert_array_equal(topk_np[b], ref)
        np.testing.assert_array_equal(topk_np[bs + b], ref1)

    # end-to-end check (PyTorch UniformMatcher semantics)
    results = uniform_matcher(pred_boxes, anchors, all_targets, sizes,
                              match_times=match_times)
    ref_results = _np_reference_matcher(pred_boxes, anchors, all_targets, sizes,
                                        match_times)
    for b in range(bs):
        i_all, j_all = results[b]
        ri, rj = ref_results[b]
        np.testing.assert_array_equal(i_all, ri)
        np.testing.assert_array_equal(j_all, rj)
        assert i_all.shape == (match_times * 2 * sizes[b],)
        assert i_all.dtype == np.int64 and j_all.dtype == np.int64

    # --- config 2: exercises the multi-tile streaming merge + ragged padding ---
    bs2, nq2 = 1, 200
    sizes2 = [5]
    kk1, kk2, kk3 = jax.random.split(jax.random.PRNGKey(1), 3)
    pred2 = _make_boxes(kk1, (bs2, nq2, 4))
    anch2 = _make_boxes(kk2, (bs2, nq2, 4))
    tgt2 = _make_boxes(kk3, (sum(sizes2), 4))
    results2 = uniform_matcher(pred2, anch2, tgt2, sizes2,
                               match_times=match_times, tile_q=128)
    ref2 = _np_reference_matcher(pred2, anch2, tgt2, sizes2, match_times)
    for b in range(bs2):
        np.testing.assert_array_equal(results2[b][0], ref2[b][0])
        np.testing.assert_array_equal(results2[b][1], ref2[b][1])

    print("KERNEL_OK")
</pallas_src>

<mosaic_0001>
module attributes {stable_mosaic.version = 11 : i64} {
  func.func @_matcher_kernel(%arg0: i32, %arg1: i32, %arg2: memref<1x16x4xf32, #tpu.memory_space<vmem>>, %arg3: memref<4x128xf32, #tpu.memory_space<vmem>>, %arg4: memref<1x8x128xi32, #tpu.memory_space<vmem>>, %arg5: memref<8x128xf32, #tpu.memory_space<vmem>>) attributes {dimension_semantics = [#tpu.dimension_semantics<parallel>, #tpu.dimension_semantics<arbitrary>], iteration_bounds = array<i64: 4, 1>, scalar_prefetch = 0 : i64, scratch_operands = 1 : i64, tpu.core_type = #tpu.core_type<tc>, window_params = [{transform_indices = @transform_0, window_bounds = array<i64: 1, 16, 4>}, {pipeline_mode = #tpu.pipeline_mode<synchronous>, transform_indices = @transform_1, window_bounds = array<i64: 4, 128>}, {transform_indices = @transform_2, window_bounds = array<i64: 1, 8, 128>}]} {
    %c0_i32 = arith.constant 0 : i32
    %0 = arith.cmpi eq, %arg1, %c0_i32 : i32
    %1 = arith.extui %0 : i1 to i32
    %c0_i32_0 = arith.constant 0 : i32
    %2 = arith.cmpi ne, %1, %c0_i32_0 : i32
    scf.if %2 {
      %cst_43 = arith.constant 0x7F800000 : f32
      %149 = vector.broadcast %cst_43 : f32 to vector<8x128xf32>
      %c0_44 = arith.constant 0 : index
      %c0_45 = arith.constant 0 : index
      %150 = vector.load %arg5[%c0_44, %c0_45] : memref<8x128xf32, #tpu.memory_space<vmem>>, vector<8x128xf32>
      tpu.vector_store %arg5[%c0_44, %c0_45], %149 {strides = array<i32>} : memref<8x128xf32, #tpu.memory_space<vmem>>, vector<8x128xf32>,
      %c2147483647_i32_46 = arith.constant 2147483647 : i32
      %151 = vector.broadcast %c2147483647_i32_46 : i32 to vector<8x128xi32>
      %c0_47 = arith.constant 0 : index
      %c0_48 = arith.constant 0 : index
      %c0_49 = arith.constant 0 : index
      %152 = vector.load %arg4[%c0_47, %c0_48, %c0_49] : memref<1x8x128xi32, #tpu.memory_space<vmem>>, vector<1x8x128xi32>
      %153 = vector.shape_cast %152 : vector<1x8x128xi32> to vector<8x128xi32>
      %154 = vector.shape_cast %151 : vector<8x128xi32> to vector<1x8x128xi32>
      tpu.vector_store %arg4[%c0_47, %c0_48, %c0_49], %154 {strides = array<i32>} : memref<1x8x128xi32, #tpu.memory_space<vmem>>, vector<1x8x128xi32>,
    } else {
    }
    %c0 = arith.constant 0 : index
    %c0_1 = arith.constant 0 : index
    %c0_2 = arith.constant 0 : index
    %3 = vector.load %arg2[%c0, %c0_1, %c0_2] : memref<1x16x4xf32, #tpu.memory_space<vmem>>, vector<1x16x4xf32>
    %4 = vector.shape_cast %3 : vector<1x16x4xf32> to vector<16x4xf32>
    %c0_3 = arith.constant 0 : index
    %c0_4 = arith.constant 0 : index
    %5 = vector.load %arg3[%c0_3, %c0_4] : memref<4x128xf32, #tpu.memory_space<vmem>>, vector<4x128xf32>
    %6 = vector.extract_strided_slice %4 {offsets = [0, 0], sizes = [16, 1], strides = [1, 1]} : vector<16x4xf32> to vector<16x1xf32>
    %7 = vector.extract_strided_slice %5 {offsets = [0, 0], sizes = [1, 128], strides = [1, 1]} : vector<4x128xf32> to vector<1x128xf32>
    %8 = vector.broadcast %6 : vector<16x1xf32> to vector<16x128xf32>
    %9 = vector.broadcast %7 : vector<1x128xf32> to vector<16x128xf32>
    %10 = arith.subf %8, %9 : vector<16x128xf32>
    %11 = math.absf %10 : vector<16x128xf32>
    %12 = vector.extract_strided_slice %4 {offsets = [0, 1], sizes = [16, 1], strides = [1, 1]} : vector<16x4xf32> to vector<16x1xf32>
    %13 = vector.extract_strided_slice %5 {offsets = [1, 0], sizes = [1, 128], strides = [1, 1]} : vector<4x128xf32> to vector<1x128xf32>
    %14 = vector.broadcast %12 : vector<16x1xf32> to vector<16x128xf32>
    %15 = vector.broadcast %13 : vector<1x128xf32> to vector<16x128xf32>
    %16 = arith.subf %14, %15 : vector<16x128xf32>
    %17 = math.absf %16 : vector<16x128xf32>
    %18 = arith.addf %11, %17 : vector<16x128xf32>
    %19 = vector.extract_strided_slice %4 {offsets = [0, 2], sizes = [16, 1], strides = [1, 1]} : vector<16x4xf32> to vector<16x1xf32>
    %20 = vector.extract_strided_slice %5 {offsets = [2, 0], sizes = [1, 128], strides = [1, 1]} : vector<4x128xf32> to vector<1x128xf32>
    %21 = vector.broadcast %19 : vector<16x1xf32> to vector<16x128xf32>
    %22 = vector.broadcast %20 : vector<1x128xf32> to vector<16x128xf32>
    %23 = arith.subf %21, %22 : vector<16x128xf32>
    %24 = math.absf %23 : vector<16x128xf32>
    %25 = arith.addf %18, %24 : vector<16x128xf32>
    %26 = vector.extract_strided_slice %4 {offsets = [0, 3], sizes = [16, 1], strides = [1, 1]} : vector<16x4xf32> to vector<16x1xf32>
    %27 = vector.extract_strided_slice %5 {offsets = [3, 0], sizes = [1, 128], strides = [1, 1]} : vector<4x128xf32> to vector<1x128xf32>
    %28 = vector.broadcast %26 : vector<16x1xf32> to vector<16x128xf32>
    %29 = vector.broadcast %27 : vector<1x128xf32> to vector<16x128xf32>
    %30 = arith.subf %28, %29 : vector<16x128xf32>
    %31 = math.absf %30 : vector<16x128xf32>
    %32 = arith.addf %25, %31 : vector<16x128xf32>
    %33 = tpu.iota {dimensions = array<i32: 0>} : vector<16x1xi32>
    %c16_i32 = arith.constant 16 : i32
    %34 = arith.muli %arg1, %c16_i32 : i32
    %35 = vector.broadcast %34 : i32 to vector<16x1xi32>
    %36 = arith.addi %33, %35 : vector<16x1xi32>
    %cst = arith.constant dense<0x7F800000> : vector<128xf32>
    %37 = vector.multi_reduction <minimumf>, %32, %cst [0] : vector<16x128xf32> to vector<128xf32>
    %38 = vector.shape_cast %37 : vector<128xf32> to vector<1x128xf32>
    %39 = vector.broadcast %38 : vector<1x128xf32> to vector<16x128xf32>
    %40 = arith.cmpf oeq, %32, %39 : vector<16x128xf32>
    %c2147483647_i32 = arith.constant 2147483647 : i32
    %41 = vector.shape_cast %36 : vector<16x1xi32> to vector<16x1xi32>
    %42 = vector.broadcast %41 : vector<16x1xi32> to vector<16x128xi32>
    %43 = vector.broadcast %c2147483647_i32 : i32 to vector<16x128xi32>
    %44 = arith.select %40, %42, %43 : vector<16x128xi1>, vector<16x128xi32>
    %cst_5 = arith.constant dense<2147483647> : vector<128xi32>
    %45 = vector.multi_reduction <minsi>, %44, %cst_5 [0] : vector<16x128xi32> to vector<128xi32>
    %46 = vector.shape_cast %45 : vector<128xi32> to vector<1x128xi32>
    %47 = vector.broadcast %36 : vector<16x1xi32> to vector<16x128xi32>
    %48 = vector.broadcast %46 : vector<1x128xi32> to vector<16x128xi32>
    %49 = arith.cmpi eq, %47, %48 : vector<16x128xi32>
    %cst_6 = arith.constant 0x7F800000 : f32
    %50 = vector.broadcast %cst_6 : f32 to vector<16x128xf32>
    %51 = arith.select %49, %50, %32 : vector<16x128xi1>, vector<16x128xf32>
    %cst_7 = arith.constant dense<0x7F800000> : vector<128xf32>
    %52 = vector.multi_reduction <minimumf>, %51, %cst_7 [0] : vector<16x128xf32> to vector<128xf32>
    %53 = vector.shape_cast %52 : vector<128xf32> to vector<1x128xf32>
    %54 = vector.broadcast %53 : vector<1x128xf32> to vector<16x128xf32>
    %55 = arith.cmpf oeq, %51, %54 : vector<16x128xf32>
    %c2147483647_i32_8 = arith.constant 2147483647 : i32
    %56 = vector.shape_cast %36 : vector<16x1xi32> to vector<16x1xi32>
    %57 = vector.broadcast %56 : vector<16x1xi32> to vector<16x128xi32>
    %58 = vector.broadcast %c2147483647_i32_8 : i32 to vector<16x128xi32>
    %59 = arith.select %55, %57, %58 : vector<16x128xi1>, vector<16x128xi32>
    %cst_9 = arith.constant dense<2147483647> : vector<128xi32>
    %60 = vector.multi_reduction <minsi>, %59, %cst_9 [0] : vector<16x128xi32> to vector<128xi32>
    %61 = vector.shape_cast %60 : vector<128xi32> to vector<1x128xi32>
    %62 = vector.broadcast %36 : vector<16x1xi32> to vector<16x128xi32>
    %63 = vector.broadcast %61 : vector<1x128xi32> to vector<16x128xi32>
    %64 = arith.cmpi eq, %62, %63 : vector<16x128xi32>
    %65 = arith.ori %49, %64 : vector<16x128xi1>
    %cst_10 = arith.constant 0x7F800000 : f32
    %66 = vector.broadcast %cst_10 : f32 to vector<16x128xf32>
    %67 = arith.select %65, %66, %32 : vector<16x128xi1>, vector<16x128xf32>
    %cst_11 = arith.constant dense<0x7F800000> : vector<128xf32>
    %68 = vector.multi_reduction <minimumf>, %67, %cst_11 [0] : vector<16x128xf32> to vector<128xf32>
    %69 = vector.shape_cast %68 : vector<128xf32> to vector<1x128xf32>
    %70 = vector.broadcast %69 : vector<1x128xf32> to vector<16x128xf32>
    %71 = arith.cmpf oeq, %67, %70 : vector<16x128xf32>
    %c2147483647_i32_12 = arith.constant 2147483647 : i32
    %72 = vector.shape_cast %36 : vector<16x1xi32> to vector<16x1xi32>
    %73 = vector.broadcast %72 : vector<16x1xi32> to vector<16x128xi32>
    %74 = vector.broadcast %c2147483647_i32_12 : i32 to vector<16x128xi32>
    %75 = arith.select %71, %73, %74 : vector<16x128xi1>, vector<16x128xi32>
    %cst_13 = arith.constant dense<2147483647> : vector<128xi32>
    %76 = vector.multi_reduction <minsi>, %75, %cst_13 [0] : vector<16x128xi32> to vector<128xi32>
    %77 = vector.shape_cast %76 : vector<128xi32> to vector<1x128xi32>
    %78 = vector.broadcast %36 : vector<16x1xi32> to vector<16x128xi32>
    %79 = vector.broadcast %77 : vector<1x128xi32> to vector<16x128xi32>
    %80 = arith.cmpi eq, %78, %79 : vector<16x128xi32>
    %81 = arith.ori %65, %80 : vector<16x128xi1>
    %cst_14 = arith.constant 0x7F800000 : f32
    %82 = vector.broadcast %cst_14 : f32 to vector<16x128xf32>
    %83 = arith.select %81, %82, %32 : vector<16x128xi1>, vector<16x128xf32>
    %cst_15 = arith.constant dense<0x7F800000> : vector<128xf32>
    %84 = vector.multi_reduction <minimumf>, %83, %cst_15 [0] : vector<16x128xf32> to vector<128xf32>
    %85 = vector.shape_cast %84 : vector<128xf32> to vector<1x128xf32>
    %86 = vector.broadcast %85 : vector<1x128xf32> to vector<16x128xf32>
    %87 = arith.cmpf oeq, %83, %86 : vector<16x128xf32>
    %c2147483647_i32_16 = arith.constant 2147483647 : i32
    %88 = vector.shape_cast %36 : vector<16x1xi32> to vector<16x1xi32>
    %89 = vector.broadcast %88 : vector<16x1xi32> to vector<16x128xi32>
    %90 = vector.broadcast %c2147483647_i32_16 : i32 to vector<16x128xi32>
    %91 = arith.select %87, %89, %90 : vector<16x128xi1>, vector<16x128xi32>
    %cst_17 = arith.constant dense<2147483647> : vector<128xi32>
    %92 = vector.multi_reduction <minsi>, %91, %cst_17 [0] : vector<16x128xi32> to vector<128xi32>
    %93 = vector.shape_cast %92 : vector<128xi32> to vector<1x128xi32>
    %c0_18 = arith.constant 0 : index
    %c0_19 = arith.constant 0 : index
    %94 = vector.load %arg5[%c0_18, %c0_19] : memref<8x128xf32, #tpu.memory_space<vmem>>, vector<8x128xf32>
    %95 = tpu.concatenate %94, %38, %53, %69, %85 in 0 : vector<8x128xf32>, vector<1x128xf32>, vector<1x128xf32>, vector<1x128xf32>, vector<1x128xf32> -> vector<12x128xf32>
    %c0_20 = arith.constant 0 : index
    %c0_21 = arith.constant 0 : index
    %c0_22 = arith.constant 0 : index
    %96 = vector.load %arg4[%c0_20, %c0_21, %c0_22] : memref<1x8x128xi32, #tpu.memory_space<vmem>>, vector<1x8x128xi32>
    %97 = vector.shape_cast %96 : vector<1x8x128xi32> to vector<8x128xi32>
    %98 = tpu.concatenate %97, %46, %61, %77, %93 in 0 : vector<8x128xi32>, vector<1x128xi32>, vector<1x128xi32>, vector<1x128xi32>, vector<1x128xi32> -> vector<12x128xi32>
    %cst_23 = arith.constant dense<0x7F800000> : vector<128xf32>
    %99 = vector.multi_reduction <minimumf>, %95, %cst_23 [0] : vector<12x128xf32> to vector<128xf32>
    %100 = vector.shape_cast %99 : vector<128xf32> to vector<1x128xf32>
    %101 = vector.broadcast %100 : vector<1x128xf32> to vector<12x128xf32>
    %102 = arith.cmpf oeq, %95, %101 : vector<12x128xf32>
    %c2147483647_i32_24 = arith.constant 2147483647 : i32
    %103 = vector.broadcast %c2147483647_i32_24 : i32 to vector<12x128xi32>
    %104 = arith.select %102, %98, %103 : vector<12x128xi1>, vector<12x128xi32>
    %cst_25 = arith.constant dense<2147483647> : vector<128xi32>
    %105 = vector.multi_reduction <minsi>, %104, %cst_25 [0] : vector<12x128xi32> to vector<128xi32>
    %106 = vector.shape_cast %105 : vector<128xi32> to vector<1x128xi32>
    %107 = vector.broadcast %106 : vector<1x128xi32> to vector<12x128xi32>
    %108 = arith.cmpi eq, %98, %107 : vector<12x128xi32>
    %cst_26 = arith.constant 0x7F800000 : f32
    %109 = vector.broadcast %cst_26 : f32 to vector<12x128xf32>
    %110 = arith.select %108, %109, %95 : vector<12x128xi1>, vector<12x128xf32>
    %cst_27 = arith.constant dense<0x7F800000> : vector<128xf32>
    %111 = vector.multi_reduction <minimumf>, %110, %cst_27 [0] : vector<12x128xf32> to vector<128xf32>
    %112 = vector.shape_cast %111 : vector<128xf32> to vector<1x128xf32>
    %113 = vector.broadcast %112 : vector<1x128xf32> to vector<12x128xf32>
    %114 = arith.cmpf oeq, %110, %113 : vector<12x128xf32>
    %c2147483647_i32_28 = arith.constant 2147483647 : i32
    %115 = vector.broadcast %c2147483647_i32_28 : i32 to vector<12x128xi32>
    %116 = arith.select %114, %98, %115 : vector<12x128xi1>, vector<12x128xi32>
    %cst_29 = arith.constant dense<2147483647> : vector<128xi32>
    %117 = vector.multi_reduction <minsi>, %116, %cst_29 [0] : vector<12x128xi32> to vector<128xi32>
    %118 = vector.shape_cast %117 : vector<128xi32> to vector<1x128xi32>
    %119 = vector.broadcast %118 : vector<1x128xi32> to vector<12x128xi32>
    %120 = arith.cmpi eq, %98, %119 : vector<12x128xi32>
    %cst_30 = arith.constant 0x7F800000 : f32
    %121 = vector.broadcast %cst_30 : f32 to vector<12x128xf32>
    %122 = arith.select %120, %121, %110 : vector<12x128xi1>, vector<12x128xf32>
    %cst_31 = arith.constant dense<0x7F800000> : vector<128xf32>
    %123 = vector.multi_reduction <minimumf>, %122, %cst_31 [0] : vector<12x128xf32> to vector<128xf32>
    %124 = vector.shape_cast %123 : vector<128xf32> to vector<1x128xf32>
    %125 = vector.broadcast %124 : vector<1x128xf32> to vector<12x128xf32>
    %126 = arith.cmpf oeq, %122, %125 : vector<12x128xf32>
    %c2147483647_i32_32 = arith.constant 2147483647 : i32
    %127 = vector.broadcast %c2147483647_i32_32 : i32 to vector<12x128xi32>
    %128 = arith.select %126, %98, %127 : vector<12x128xi1>, vector<12x128xi32>
    %cst_33 = arith.constant dense<2147483647> : vector<128xi32>
    %129 = vector.multi_reduction <minsi>, %128, %cst_33 [0] : vector<12x128xi32> to vector<128xi32>
    %130 = vector.shape_cast %129 : vector<128xi32> to vector<1x128xi32>
    %131 = vector.broadcast %130 : vector<1x128xi32> to vector<12x128xi32>
    %132 = arith.cmpi eq, %98, %131 : vector<12x128xi32>
    %cst_34 = arith.constant 0x7F800000 : f32
    %133 = vector.broadcast %cst_34 : f32 to vector<12x128xf32>
    %134 = arith.select %132, %133, %122 : vector<12x128xi1>, vector<12x128xf32>
    %cst_35 = arith.constant dense<0x7F800000> : vector<128xf32>
    %135 = vector.multi_reduction <minimumf>, %134, %cst_35 [0] : vector<12x128xf32> to vector<128xf32>
    %136 = vector.shape_cast %135 : vector<128xf32> to vector<1x128xf32>
    %137 = vector.broadcast %136 : vector<1x128xf32> to vector<12x128xf32>
    %138 = arith.cmpf oeq, %134, %137 : vector<12x128xf32>
    %c2147483647_i32_36 = arith.constant 2147483647 : i32
    %139 = vector.broadcast %c2147483647_i32_36 : i32 to vector<12x128xi32>
    %140 = arith.select %138, %98, %139 : vector<12x128xi1>, vector<12x128xi32>
    %cst_37 = arith.constant dense<2147483647> : vector<128xi32>
    %141 = vector.multi_reduction <minsi>, %140, %cst_37 [0] : vector<12x128xi32> to vector<128xi32>
    %142 = vector.shape_cast %141 : vector<128xi32> to vector<1x128xi32>
    %143 = tpu.concatenate %100, %112, %124, %136 in 0 : vector<1x128xf32>, vector<1x128xf32>, vector<1x128xf32>, vector<1x128xf32> -> vector<4x128xf32>
    %c0_38 = arith.constant 0 : index
    %c0_39 = arith.constant 0 : index
    %144 = vector.load %arg5[%c0_38, %c0_39] : memref<8x128xf32, #tpu.memory_space<vmem>>, vector<4x128xf32>
    tpu.vector_store %arg5[%c0_38, %c0_39], %143 {strides = array<i32>} : memref<8x128xf32, #tpu.memory_space<vmem>>, vector<4x128xf32>,
    %145 = tpu.concatenate %106, %118, %130, %142 in 0 : vector<1x128xi32>, vector<1x128xi32>, vector<1x128xi32>, vector<1x128xi32> -> vector<4x128xi32>
    %c0_40 = arith.constant 0 : index
    %c0_41 = arith.constant 0 : index
    %c0_42 = arith.constant 0 : index
    %146 = vector.load %arg4[%c0_40, %c0_41, %c0_42] : memref<1x8x128xi32, #tpu.memory_space<vmem>>, vector<1x4x128xi32>
    %147 = vector.shape_cast %146 : vector<1x4x128xi32> to vector<4x128xi32>
    %148 = vector.shape_cast %145 : vector<4x128xi32> to vector<1x4x128xi32>
    tpu.vector_store %arg4[%c0_40, %c0_41, %c0_42], %148 {strides = array<i32>} : memref<1x8x128xi32, #tpu.memory_space<vmem>>, vector<1x4x128xi32>,
    return
  }
  func.func @transform_0(%arg0: i32, %arg1: i32) -> (i32, i32, i32) {
    %c0_i32 = arith.constant 0 : i32
    %c0_i32_0 = arith.constant 0 : i32
    return %arg0, %arg1, %c0_i32 : i32, i32, i32
  }
  func.func @transform_1(%arg0: i32, %arg1: i32) -> (i32, i32) {
    %c0_i32 = arith.constant 0 : i32
    %c0_i32_0 = arith.constant 0 : i32
    %c0_i32_1 = arith.constant 0 : i32
    return %c0_i32, %c0_i32_0 : i32, i32
  }
  func.func @transform_2(%arg0: i32, %arg1: i32) -> (i32, i32, i32) {
    %c0_i32 = arith.constant 0 : i32
    %c0_i32_0 = arith.constant 0 : i32
    %c0_i32_1 = arith.constant 0 : i32
    return %arg0, %c0_i32, %c0_i32_0 : i32, i32, i32
  }
}

</mosaic_0001>

<llo_original>
// kernel: uniform_topk.1
$region0: #{uniform_topk.1}
  #allocation0 [shape = 'u32[]', space=smem, size = 0x4, offset = 0x4, fixed_abs, tag = 'smem constant byte address 0x4 - core index']
  #allocation1 [shape = 'u32[144,128]{1,0:T(1,128)}', space=vmem, size = 0x12000, scoped, tag = 'internal scratch']
  #allocation2 [shape = 'f32[8,128]{1,0:T(8,128)}', space=vmem, size = 0x1000, scoped, tag = 'scratch operand']
  %s0 = inlined_call_operand.vmem [shape: f32[4,16,4], index: 0, kind: input, shape index: {}]
  %s1 = inlined_call_operand.vmem [shape: f32[4,128], index: 1, kind: input, shape index: {}]
  %s2 = inlined_call_operand.vmem [shape: s32[4,8,128], index: 2, kind: output, shape index: {}]
  %s3 = sld [smem:[#allocation0]]
  $region45: #{uniform_topk.1} parent=0
    _
  %s5 = ssub.s32 1, %s3
  %s6 = scalar_select 0, %s5, %s3
  loop: start=0, step=1, limit=6
  $region2: #{uniform_topk.1} parent=0 // loop_pre_header
    _
  $region3: #{uniform_topk.1} parent=0 // loop_header
    %s8 = sphi 0, %s12
    %p9 = scmp.ge.s32.totalorder %s8, 6
    %s15 = sphi 0, %s27
    %s16 = sphi 0, %s23
    %s17 = sphi 0, %s15
    %s18 = sphi 0, %s16
    %s19 = sphi 0, %s17
    %s20 = sphi 0, %s18
    %s32 = sphi 0, %s34
    %s35 = sphi 0, %s32
    %s36 = sphi 0, %s35
    %s52 = sphi 0, %s36
    %s56 = sphi 0, %s56
    %s58 = sphi 0, %s56
    %s59 = sphi 0, %s58
    %s73 = sphi 0, %s59
    %s79 = sphi 0, %s81
    %s82 = sphi 0, %s79
    %s83 = sphi 0, %s82
    %s99 = sphi 0, %s83
  $region4: #{uniform_topk.1} parent=0 // loop_header_branch
    %11 = sbr.rel (%p9) target = $region8
  $region5: #{uniform_topk.1} parent=0 // loop_body
    %s13 = ssub.s32 %s8, 1
    %s14 = ssub.s32 %s8, 2
    %s21 = sadd.s32 1, %s16
    %p22 = scmp.ge.s32.totalorder %s21, 1
    %s23 = scalar_select %p22, 0, %s21
    %s24 = sadd.s32 1, %s15
    %s25 = scalar_select %p22, %s24, %s15
    %p26 = scmp.ge.s32.totalorder %s25, 4
    %s27 = scalar_select %p26, 0, %s25
    %s28 = ssub.s32 %s15, %s27
    %s29 = ssub.s32 %s16, %s23
    %s30 = sor.u32 %s28, %s29
    %p31 = scmp.eq.s32.totalorder %s30, 0
    %s33 = sadd.s32 %s32, 1
    %s34 = scalar_select %p31, %s32, %s33
    %p37 = pneg %p31
    %p38 = scmp.eq.s32.totalorder %s8, 3
    %p39 = por %p37, %p38
    %p40 = scmp.ne.s32.totalorder %s32, %s35
    %p41 = scmp.eq.s32.totalorder %s8, 0
    %p42 = por %p40, %p41
    %p43 = scmp.ne.s32.totalorder %s32, %s35
    %p44 = scmp.eq.s32.totalorder %s13, 3
    %p45 = por %p43, %p44
    %p46 = scmp.ne.s32.totalorder %s35, %s36
    %p47 = scmp.eq.s32.totalorder %s13, 0
    %p48 = por %p46, %p47
    %p49 = scmp.ne.s32.totalorder %s35, %s36
    %p50 = scmp.eq.s32.totalorder %s14, 3
    %p51 = por %p49, %p50
    %p53 = scmp.ne.s32.totalorder %s36, %s52
    %p54 = scmp.eq.s32.totalorder %s14, 0
    %p55 = por %p53, %p54
    %s57 = sadd.s32 %s56, 1
    %p60 = scmp.eq.s32.totalorder %s8, 3
    %p61 = scmp.ne.s32.totalorder %s56, %s58
    %p62 = scmp.eq.s32.totalorder %s8, 0
    %p63 = por %p61, %p62
    %p64 = scmp.ne.s32.totalorder %s56, %s58
    %p65 = scmp.eq.s32.totalorder %s13, 3
    %p66 = por %p64, %p65
    %p67 = scmp.ne.s32.totalorder %s58, %s59
    %p68 = scmp.eq.s32.totalorder %s13, 0
    %p69 = por %p67, %p68
    %p70 = scmp.ne.s32.totalorder %s58, %s59
    %p71 = scmp.eq.s32.totalorder %s14, 3
    %p72 = por %p70, %p71
    %p74 = scmp.ne.s32.totalorder %s59, %s73
    %p75 = scmp.eq.s32.totalorder %s14, 0
    %p76 = por %p74, %p75
    %s77 = ssub.s32 %s15, %s27
    %p78 = scmp.eq.s32.totalorder %s77, 0
    %s80 = sadd.s32 %s79, 1
    %s81 = scalar_select %p78, %s79, %s80
    %p84 = pneg %p78
    %p85 = scmp.eq.s32.totalorder %s8, 3
    %p86 = por %p84, %p85
    %p87 = scmp.ne.s32.totalorder %s79, %s82
    %p88 = scmp.eq.s32.totalorder %s8, 0
    %p89 = por %p87, %p88
    %p90 = scmp.ne.s32.totalorder %s79, %s82
    %p91 = scmp.eq.s32.totalorder %s13, 3
    %p92 = por %p90, %p91
    %p93 = scmp.ne.s32.totalorder %s82, %s83
    %p94 = scmp.eq.s32.totalorder %s13, 0
    %p95 = por %p93, %p94
    %p96 = scmp.ne.s32.totalorder %s82, %s83
    %p97 = scmp.eq.s32.totalorder %s14, 3
    %p98 = por %p96, %p97
    %p100 = scmp.ne.s32.totalorder %s83, %s99
    %p101 = scmp.eq.s32.totalorder %s14, 0
    %p102 = por %p100, %p101
    %p103 = scmp.le.s32.totalorder 1, %s8
    %p104 = scmp.lt.s32.totalorder %s8, 5
    %p105 = pnand %p103, %p104
    %p106 = pneg %p105
    // Predicated region
    $region9: #{uniform_topk.1} parent=5 // pred_check
      _
    $region10: #{uniform_topk.1} parent=5 // pred_check_branch
      %108 = sbr.rel (%p105) target = $region12
    $region11: #{uniform_topk.1} parent=5 // pred_region
      %s109 = ssub.s32 %s8, 1
      // Predicated region
      $region13: #{uniform_topk.1} parent=11 // pred_check
        %p110 = pneg %p69
      $region14: #{uniform_topk.1} parent=11 // pred_check_branch
        %112 = sbr.rel (%p110) target = $region16
      $region15: #{uniform_topk.1} parent=11 // pred_region
        _
      $region16: #{uniform_topk.1} parent=11 // pred_fallthru
        _
    $region12: #{uniform_topk.1} parent=5 // pred_fallthru
      _
    %p113 = scmp.lt.s32.totalorder %s8, 4
    // Predicated region
    $region17: #{uniform_topk.1} parent=5 // pred_check
      %p114 = pneg %p113
    $region18: #{uniform_topk.1} parent=5 // pred_check_branch
      %116 = sbr.rel (%p114) target = $region20
    $region19: #{uniform_topk.1} parent=5 // pred_region
      // Predicated region
      $region21: #{uniform_topk.1} parent=19 // pred_check
        %p117 = pneg %p42
      $region22: #{uniform_topk.1} parent=19 // pred_check_branch
        %119 = sbr.rel (%p117) target = $region24
      $region23: #{uniform_topk.1} parent=19 // pred_region
        %s120 = smul.u32 2, %s16
        %p121 = scmp.lt.s32.totalorder %s15, 3
        %s122 = scalar_select %p121, %s15, 3
        %p123 = scmp.lt.s32.totalorder %s120, 1
        %s124 = scalar_select %p123, %s120, 1
        %s125 = smul.addr %s122, 2
        %s126 = sadd.s32 %s124, %s125
        %s127 = smul.addr %s126, 8
        %s128 = scalar_lea.vmem %s0, %s127
        %s129 = smul.u32 2, %s16
      $region24: #{uniform_topk.1} parent=19 // pred_fallthru
        _
    $region20: #{uniform_topk.1} parent=5 // pred_fallthru
      _
    %p130 = scmp.le.s32.totalorder 1, %s8
    %p131 = scmp.lt.s32.totalorder %s8, 5
    %p132 = pnand %p130, %p131
    %p133 = pneg %p132
    // Predicated region
    $region25: #{uniform_topk.1} parent=5 // pred_check
      _
    $region26: #{uniform_topk.1} parent=5 // pred_check_branch
      %135 = sbr.rel (%p132) target = $region28
    $region27: #{uniform_topk.1} parent=5 // pred_region
      %s136 = ssub.s32 %s8, 1
      %s137 = smul.u32 2, %s18
      %p138 = scmp.lt.s32.totalorder %s17, 3
      %s139 = scalar_select %p138, %s17, 3
      %p140 = scmp.lt.s32.totalorder %s137, 1
      %s141 = scalar_select %p140, %s137, 1
      %s142 = smul.addr %s139, 2
      %s143 = sadd.s32 %s141, %s142
      %s144 = smul.addr %s143, 8
      %s145 = scalar_lea.vmem %s0, %s144
      %p146 = pneg %p48
      %p147 = pneg %p45
      %p148 = pneg %p69
      %p149 = pneg %p66
      %p150 = pneg %p95
      %p151 = pneg %p92
      %p152 = scmp.lt.s32.totalorder %s17, 3
      %s153 = scalar_select %p152, %s17, 3
      %s154 = smul.addr %s153, 8
      %s155 = scalar_lea.vmem %s2, %s154
      %s156 = smul.u32 2, %s18
      %p157 = scmp.lt.s32.totalorder %s17, 3
      %s158 = scalar_select %p157, %s17, 3
      %p159 = scmp.lt.s32.totalorder %s156, 1
      %s160 = scalar_select %p159, %s156, 1
      %s161 = smul.addr %s158, 2
      %s162 = sadd.s32 %s160, %s161
      %s163 = smul.addr %s162, 8
      %s164 = scalar_lea.vmem %s0, %s163
      %s165 = smul.u32 2, %s18
      %p166 = scmp.lt.s32.totalorder %s17, 3
      %s167 = scalar_select %p166, %s17, 3
      %s168 = smul.addr %s167, 8
      %s169 = scalar_lea.vmem %s2, %s168
      %p170 = scmp.eq.s32.totalorder %s18, 0
      // Predicated region
      $region29: #{uniform_topk.1} parent=27 // pred_check
        %p171 = pneg %p170
      $region30: #{uniform_topk.1} parent=27 // pred_check_branch
        %173 = sbr.rel (%p171) target = $region32
      $region31: #{uniform_topk.1} parent=27 // pred_region
        %174 = vst [vmem:[#allocation2] sm:$0xff] inf
        %175 = vst [vmem:[%s169] sm:$0xff] 2147483647
      $region32: #{uniform_topk.1} parent=27 // pred_fallthru
        _
      %v176 = vld [vmem:[%s164] sm:$0xff]
      %v177 = vld [vmem:[%s164 + $0x8] sm:$0xff]
      %v178 = vld [vmem:[%s1] sm:$0xf]
      %180 = vset.pattern.permute.xlu0 0
      %181 = vperm.xlu0 %180, %v176
      %v182 = vpop.permute.xlu0 %181
      %185 = vset.pattern.permute.xlu0 0
      %186 = vperm.xlu0 %185, %v177
      %v187 = vpop.permute.xlu0 %186
      %v189 = vlaneseq
      %v190 = vshrl.u32 %v189, 7
      %v191 = vsub.s32 0, %v190
      %v192 = vrot.slane %v178, %v191
      %v193 = vsub.f32 %v182, %v192
      %v194 = vsub.f32 %v187, %v192
      %v195 = vand.u32 2147483647, %v193
      %v196 = vand.u32 2147483647, %v194
      %197 = vset.pattern.permute.xlu0 1
      %198 = vperm.xlu0 %197, %v176
      %v199 = vpop.permute.xlu0 %198
      %201 = vset.pattern.permute.xlu0 1
      %202 = vperm.xlu0 %201, %v177
      %v203 = vpop.permute.xlu0 %202
      %v205 = vlaneseq
      %v206 = vshrl.u32 %v205, 7
      %v207 = vsub.s32 1, %v206
      %v208 = vrot.slane %v178, %v207
      %v209 = vsub.f32 %v199, %v208
      %v210 = vsub.f32 %v203, %v208
      %v211 = vand.u32 2147483647, %v209
      %v212 = vand.u32 2147483647, %v210
      %v213 = vadd.f32 %v195, %v211
      %v214 = vadd.f32 %v196, %v212
      %215 = vset.pattern.permute.xlu0 2
      %216 = vperm.xlu0 %215, %v176
      %v217 = vpop.permute.xlu0 %216
      %219 = vset.pattern.permute.xlu0 2
      %220 = vperm.xlu0 %219, %v177
      %v221 = vpop.permute.xlu0 %220
      %v223 = vlaneseq
      %v224 = vshrl.u32 %v223, 7
      %v225 = vsub.s32 2, %v224
      %v226 = vrot.slane %v178, %v225
      %v227 = vsub.f32 %v217, %v226
      %v228 = vsub.f32 %v221, %v226
      %v229 = vand.u32 2147483647, %v227
      %v230 = vand.u32 2147483647, %v228
      %v231 = vadd.f32 %v213, %v229
      %v232 = vadd.f32 %v214, %v230
      %233 = vset.pattern.permute.xlu0 3
      %234 = vperm.xlu0 %233, %v176
      %v235 = vpop.permute.xlu0 %234
      %237 = vset.pattern.permute.xlu0 3
      %238 = vperm.xlu0 %237, %v177
      %v239 = vpop.permute.xlu0 %238
      %v241 = vlaneseq
      %v242 = vshrl.u32 %v241, 7
      %v243 = vsub.s32 3, %v242
      %v244 = vrot.slane %v178, %v243
      %v245 = vsub.f32 %v235, %v244
      %v246 = vsub.f32 %v239, %v244
      %v247 = vand.u32 2147483647, %v245
      %v248 = vand.u32 2147483647, %v246
      %v249 = vadd.f32 %v231, %v247
      %v250 = vadd.f32 %v232, %v248
      %v251 = vlaneseq
      %v252 = vshrl.u32 %v251, 7
      %v253 = vadd.s32 %v252, 8
      %s254 = smul.u32 %s18, 16
      %v255 = vstv %s254
      %v256 = vadd.s32 %v252, %v255
      %v257 = vadd.s32 %v253, %v255
      %v258 = vmin.f32 %v249, %v250
      %v259 = vrot.slane %v258, 4
      %v260 = vmin.f32 %v258, %v259
      %v261 = vrot.slane %v260, 2
      %v262 = vmin.f32 %v260, %v261
      %v263 = vrot.slane %v262, 1
      %v264 = vmin.f32 %v262, %v263
      %vm265 = vcmp.eq.f32.partialorder %v249, %v264
      %vm266 = vcmp.eq.f32.partialorder %v250, %v264
      %v267 = vsel %vm265, %v256, 2147483647
      %v268 = vsel %vm266, %v257, 2147483647
      %vm269 = vcmp.lt.s32.totalorder %v267, %v268
      %v270 = vsel %vm269, %v267, %v268
      %v271 = vrot.slane %v270, 4
      %vm272 = vcmp.lt.s32.totalorder %v270, %v271
      %v273 = vsel %vm272, %v270, %v271
      %v274 = vrot.slane %v273, 2
      %vm275 = vcmp.lt.s32.totalorder %v273, %v274
      %v276 = vsel %vm275, %v273, %v274
      %v277 = vrot.slane %v276, 1
      %vm278 = vcmp.lt.s32.totalorder %v276, %v277
      %v279 = vsel %vm278, %v276, %v277
      %vm280 = vcmp.eq.s32.totalorder %v256, %v279
      %vm281 = vcmp.eq.s32.totalorder %v257, %v279
      %v282 = vsel %vm280, inf, %v249
      %v283 = vsel %vm281, inf, %v250
      %v284 = vmin.f32 %v282, %v283
      %v285 = vrot.slane %v284, 4
      %v286 = vmin.f32 %v284, %v285
      %v287 = vrot.slane %v286, 2
      %v288 = vmin.f32 %v286, %v287
      %v289 = vrot.slane %v288, 1
      %v290 = vmin.f32 %v288, %v289
      %vm291 = vcmp.eq.f32.partialorder %v282, %v290
      %vm292 = vcmp.eq.f32.partialorder %v283, %v290
      %v293 = vsel %vm291, %v256, 2147483647
      %v294 = vsel %vm292, %v257, 2147483647
      %vm295 = vcmp.lt.s32.totalorder %v293, %v294
      %v296 = vsel %vm295, %v293, %v294
      %v297 = vrot.slane %v296, 4
      %vm298 = vcmp.lt.s32.totalorder %v296, %v297
      %v299 = vsel %vm298, %v296, %v297
      %v300 = vrot.slane %v299, 2
      %vm301 = vcmp.lt.s32.totalorder %v299, %v300
      %v302 = vsel %vm301, %v299, %v300
      %v303 = vrot.slane %v302, 1
      %vm304 = vcmp.lt.s32.totalorder %v302, %v303
      %v305 = vsel %vm304, %v302, %v303
      %vm306 = vcmp.eq.s32.totalorder %v256, %v305
      %vm307 = vcmp.eq.s32.totalorder %v257, %v305
      %vm308 = vmor %vm280, %vm306
      %vm309 = vmor %vm281, %vm307
      %v310 = vsel %vm308, inf, %v249
      %v311 = vsel %vm309, inf, %v250
      %v312 = vmin.f32 %v310, %v311
      %v313 = vrot.slane %v312, 4
      %v314 = vmin.f32 %v312, %v313
      %v315 = vrot.slane %v314, 2
      %v316 = vmin.f32 %v314, %v315
      %v317 = vrot.slane %v316, 1
      %v318 = vmin.f32 %v316, %v317
      %vm319 = vcmp.eq.f32.partialorder %v310, %v318
      %vm320 = vcmp.eq.f32.partialorder %v311, %v318
      %v321 = vsel %vm319, %v256, 2147483647
      %v322 = vsel %vm320, %v257, 2147483647
      %vm323 = vcmp.lt.s32.totalorder %v321, %v322
      %v324 = vsel %vm323, %v321, %v322
      %v325 = vrot.slane %v324, 4
      %vm326 = vcmp.lt.s32.totalorder %v324, %v325
      %v327 = vsel %vm326, %v324, %v325
      %v328 = vrot.slane %v327, 2
      %vm329 = vcmp.lt.s32.totalorder %v327, %v328
      %v330 = vsel %vm329, %v327, %v328
      %v331 = vrot.slane %v330, 1
      %vm332 = vcmp.lt.s32.totalorder %v330, %v331
      %v333 = vsel %vm332, %v330, %v331
      %vm334 = vcmp.eq.s32.totalorder %v256, %v333
      %vm335 = vcmp.eq.s32.totalorder %v257, %v333
      %vm336 = vmor %vm308, %vm334
      %vm337 = vmor %vm309, %vm335
      %v338 = vsel %vm336, inf, %v249
      %v339 = vsel %vm337, inf, %v250
      %v340 = vmin.f32 %v338, %v339
      %v341 = vrot.slane %v340, 4
      %v342 = vmin.f32 %v340, %v341
      %v343 = vrot.slane %v342, 2
      %v344 = vmin.f32 %v342, %v343
      %v345 = vrot.slane %v344, 1
      %v346 = vmin.f32 %v344, %v345
      %vm347 = vcmp.eq.f32.partialorder %v338, %v346
      %vm348 = vcmp.eq.f32.partialorder %v339, %v346
      %v349 = vsel %vm347, %v256, 2147483647
      %v350 = vsel %vm348, %v257, 2147483647
      %vm351 = vcmp.lt.s32.totalorder %v349, %v350
      %v352 = vsel %vm351, %v349, %v350
      %v353 = vrot.slane %v352, 4
      %vm354 = vcmp.lt.s32.totalorder %v352, %v353
      %v355 = vsel %vm354, %v352, %v353
      %v356 = vrot.slane %v355, 2
      %vm357 = vcmp.lt.s32.totalorder %v355, %v356
      %v358 = vsel %vm357, %v355, %v356
      %v359 = vrot.slane %v358, 1
      %vm360 = vcmp.lt.s32.totalorder %v358, %v359
      %v361 = vsel %vm360, %v358, %v359
      %v362 = vld [vmem:[#allocation2] sm:$0xff]
      %vm363 = vcmask 1040384
      %v364 = vsel %vm363, %v264, %v290
      %vm365 = vcmask 1041408
      %v366 = vsel %vm365, %v364, %v318
      %vm367 = vcmask 1042432
      %v368 = vsel %vm367, %v366, %v346
      %v369 = vld [vmem:[%s169] sm:$0xff]
      %v370 = vsel %vm363, %v279, %v305
      %v371 = vsel %vm365, %v370, %v333
      %v372 = vsel %vm367, %v371, %v361
      %vm373 = vcmask 1043456
      %v374 = vsel %vm373, %v368, inf
      %v375 = vmin.f32 %v362, %v374
      %v376 = vrot.slane %v375, 4
      %v377 = vmin.f32 %v375, %v376
      %v378 = vrot.slane %v377, 2
      %v379 = vmin.f32 %v377, %v378
      %v380 = vrot.slane %v379, 1
      %v381 = vmin.f32 %v379, %v380
      %vm382 = vcmp.eq.f32.partialorder %v362, %v381
      %vm383 = vcmp.eq.f32.partialorder %v368, %v381
      %v384 = vsel %vm382, %v369, 2147483647
      %v385 = vsel %vm383, %v372, 2147483647
      %v386 = vsel %vm373, %v385, 2147483647
      %vm387 = vcmp.lt.s32.totalorder %v384, %v386
      %v388 = vsel %vm387, %v384, %v386
      %v389 = vrot.slane %v388, 4
      %vm390 = vcmp.lt.s32.totalorder %v388, %v389
      %v391 = vsel %vm390, %v388, %v389
      %v392 = vrot.slane %v391, 2
      %vm393 = vcmp.lt.s32.totalorder %v391, %v392
      %v394 = vsel %vm393, %v391, %v392
      %v395 = vrot.slane %v394, 1
      %vm396 = vcmp.lt.s32.totalorder %v394, %v395
      %v397 = vsel %vm396, %v394, %v395
      %vm398 = vcmp.eq.s32.totalorder %v369, %v397
      %vm399 = vcmp.eq.s32.totalorder %v372, %v397
      %v400 = vsel %vm398, inf, %v362
      %v401 = vsel %vm399, inf, %v368
      %v402 = vsel %vm373, %v401, inf
      %v403 = vmin.f32 %v400, %v402
      %v404 = vrot.slane %v403, 4
      %v405 = vmin.f32 %v403, %v404
      %v406 = vrot.slane %v405, 2
      %v407 = vmin.f32 %v405, %v406
      %v408 = vrot.slane %v407, 1
      %v409 = vmin.f32 %v407, %v408
      %vm410 = vcmp.eq.f32.partialorder %v400, %v409
      %vm411 = vcmp.eq.f32.partialorder %v401, %v409
      %v412 = vsel %vm410, %v369, 2147483647
      %v413 = vsel %vm411, %v372, 2147483647
      %v414 = vsel %vm373, %v413, 2147483647
      %vm415 = vcmp.lt.s32.totalorder %v412, %v414
      %v416 = vsel %vm415, %v412, %v414
      %v417 = vrot.slane %v416, 4
      %vm418 = vcmp.lt.s32.totalorder %v416, %v417
      %v419 = vsel %vm418, %v416, %v417
      %v420 = vrot.slane %v419, 2
      %vm421 = vcmp.lt.s32.totalorder %v419, %v420
      %v422 = vsel %vm421, %v419, %v420
      %v423 = vrot.slane %v422, 1
      %vm424 = vcmp.lt.s32.totalorder %v422, %v423
      %v425 = vsel %vm424, %v422, %v423
      %vm426 = vcmp.eq.s32.totalorder %v369, %v425
      %vm427 = vcmp.eq.s32.totalorder %v372, %v425
      %v428 = vsel %vm426, inf, %v400
      %v429 = vsel %vm427, inf, %v401
      %v430 = vsel %vm373, %v429, inf
      %v431 = vmin.f32 %v428, %v430
      %v432 = vrot.slane %v431, 4
      %v433 = vmin.f32 %v431, %v432
      %v434 = vrot.slane %v433, 2
      %v435 = vmin.f32 %v433, %v434
      %v436 = vrot.slane %v435, 1
      %v437 = vmin.f32 %v435, %v436
      %vm438 = vcmp.eq.f32.partialorder %v428, %v437
      %vm439 = vcmp.eq.f32.partialorder %v429, %v437
      %v440 = vsel %vm438, %v369, 2147483647
      %v441 = vsel %vm439, %v372, 2147483647
      %v442 = vsel %vm373, %v441, 2147483647
      %vm443 = vcmp.lt.s32.totalorder %v440, %v442
      %v444 = vsel %vm443, %v440, %v442
      %v445 = vrot.slane %v444, 4
      %vm446 = vcmp.lt.s32.totalorder %v444, %v445
      %v447 = vsel %vm446, %v444, %v445
      %v448 = vrot.slane %v447, 2
      %vm449 = vcmp.lt.s32.totalorder %v447, %v448
      %v450 = vsel %vm449, %v447, %v448
      %v451 = vrot.slane %v450, 1
      %vm452 = vcmp.lt.s32.totalorder %v450, %v451
      %v453 = vsel %vm452, %v450, %v451
      %vm454 = vcmp.eq.s32.totalorder %v369, %v453
      %vm455 = vcmp.eq.s32.totalorder %v372, %v453
      %v456 = vsel %vm454, inf, %v428
      %v457 = vsel %vm455, inf, %v429
      %v458 = vsel %vm373, %v457, inf
      %v459 = vmin.f32 %v456, %v458
      %v460 = vrot.slane %v459, 4
      %v461 = vmin.f32 %v459, %v460
      %v462 = vrot.slane %v461, 2
      %v463 = vmin.f32 %v461, %v462
      %v464 = vrot.slane %v463, 1
      %v465 = vmin.f32 %v463, %v464
      %vm466 = vcmp.eq.f32.partialorder %v456, %v465
      %vm467 = vcmp.eq.f32.partialorder %v457, %v465
      %v468 = vsel %vm466, %v369, 2147483647
      %v469 = vsel %vm467, %v372, 2147483647
      %v470 = vsel %vm373, %v469, 2147483647
      %vm471 = vcmp.lt.s32.totalorder %v468, %v470
      %v472 = vsel %vm471, %v468, %v470
      %v473 = vrot.slane %v472, 4
      %vm474 = vcmp.lt.s32.totalorder %v472, %v473
      %v475 = vsel %vm474, %v472, %v473
      %v476 = vrot.slane %v475, 2
      %vm477 = vcmp.lt.s32.totalorder %v475, %v476
      %v478 = vsel %vm477, %v475, %v476
      %v479 = vrot.slane %v478, 1
      %vm480 = vcmp.lt.s32.totalorder %v478, %v479
      %v481 = vsel %vm480, %v478, %v479
      %v482 = vsel %vm363, %v381, %v409
      %v483 = vsel %vm365, %v482, %v437
      %v484 = vsel %vm367, %v483, %v465
      %485 = vst [vmem:[#allocation2] sm:$0xf] %v484
      %v486 = vsel %vm363, %v397, %v425
      %v487 = vsel %vm365, %v486, %v453
      %v488 = vsel %vm367, %v487, %v481
      %489 = vst [vmem:[%s169] sm:$0xf] %v488
      %p490 = scmp.lt.s32.totalorder %s17, 3
      %s491 = scalar_select %p490, %s17, 3
      %s492 = smul.addr %s491, 8
      %s493 = scalar_lea.vmem %s2, %s492
      // Predicated region
      $region33: #{uniform_topk.1} parent=27 // pred_check
        %p494 = pneg %p92
      $region34: #{uniform_topk.1} parent=27 // pred_check_branch
        %496 = sbr.rel (%p494) target = $region36
      $region35: #{uniform_topk.1} parent=27 // pred_region
        _
      $region36: #{uniform_topk.1} parent=27 // pred_fallthru
        _
    $region28: #{uniform_topk.1} parent=5 // pred_fallthru
      _
    %p497 = scmp.le.s32.totalorder 2, %s8
    // Predicated region
    $region37: #{uniform_topk.1} parent=5 // pred_check
      %p498 = pneg %p497
    $region38: #{uniform_topk.1} parent=5 // pred_check_branch
      %500 = sbr.rel (%p498) target = $region40
    $region39: #{uniform_topk.1} parent=5 // pred_region
      %s501 = ssub.s32 %s8, 2
      // Predicated region
      $region41: #{uniform_topk.1} parent=39 // pred_check
        %p502 = pneg %p98
      $region42: #{uniform_topk.1} parent=39 // pred_check_branch
        %504 = sbr.rel (%p502) target = $region44
      $region43: #{uniform_topk.1} parent=39 // pred_region
        %p505 = scmp.lt.s32.totalorder %s19, 3
        %s506 = scalar_select %p505, %s19, 3
        %s507 = smul.addr %s506, 8
        %s508 = scalar_lea.vmem %s2, %s507
      $region44: #{uniform_topk.1} parent=39 // pred_fallthru
        _
    $region40: #{uniform_topk.1} parent=5 // pred_fallthru
      _
  $region6: #{uniform_topk.1} parent=0 // loop_footer
    %s12 = sadd.s32 1, %s8
  $region7: #{uniform_topk.1} parent=0 // loop_footer_branch
    %7 = sbr.rel target = $region3
  $region8: #{uniform_topk.1} parent=0 // loop_exit
    _

</llo_original>
